<compile_context>
chip_gen: v5e
topology: v5e:2x2
jax: 0.10.0
libtpu: 0.0.40
codegen_flags: <defaults>
</compile_context>

<pallas_src>
import functools

import jax
import jax.numpy as jnp
from jax.experimental import pallas as pl
from jax.experimental.pallas import tpu as pltpu


def _depthwise3x3(padded_ref, w_taps, bias, mask_l, mask_r, H, W):
    """Depthwise 3x3 conv (stride 1, pad 1) on a flattened, halo-padded slab.

    padded_ref: (R, H*W + 2*W + 2) ref; lane W+1+q holds flat pixel q of row r's
                (H, W) plane, with zeros in the (W+1)-wide halos.
    w_taps:     (R, 9) per-row 3x3 taps, k = (dy+1)*3 + (dx+1).
    bias:       (R, 1).
    mask_l/r:   (1, H*W) multiplicative masks for pixels that have a valid
                left / right neighbour (column boundaries of the flat layout).
    Returns (R, H*W).
    """
    HW = H * W
    base = W + 1
    acc = None
    for dx in (-1, 0, 1):
        part = None
        for dy in (-1, 0, 1):
            off = base + dy * W + dx
            k = (dy + 1) * 3 + (dx + 1)
            term = padded_ref[:, off:off + HW] * w_taps[:, k:k + 1]
            part = term if part is None else part + term
        if dx == -1:
            part = part * mask_l
        elif dx == 1:
            part = part * mask_r
        acc = part if acc is None else acc + part
    return acc + bias


def separable_conv2d_kernel(H, W,
                            x_ref,      # (N*Cin, HW) input slab, VMEM
                            dwp_ref,    # (N*Cin, 20) packed [w1|b1|w2|b2]
                            alpha_ref,  # (1, 1)      PReLU alpha, SMEM
                            wpw_ref,    # (N*Cout, N*Cin) block-diag pointwise w
                            bpw_ref,    # (N*Cout, 1)
                            cmask_ref,  # (2, HW) column-boundary masks
                            o_ref,      # (N*Cout, HW) output, VMEM
                            he_ref):    # (N*Cin, HW+2W+2) halo-padded scratch
    HW = H * W
    base = W + 1
    R = he_ref.shape[0]

    mask_l = cmask_ref[0:1, :]
    mask_r = cmask_ref[1:2, :]

    w1 = dwp_ref[:, 0:9]
    b1 = dwp_ref[:, 9:10]
    w2 = dwp_ref[:, 10:19]
    b2 = dwp_ref[:, 19:20]

    # Zero the two (W+1)-wide halo strips once; reused by both depthwise convs.
    zeros_halo = jnp.zeros((R, base), he_ref.dtype)
    he_ref[:, 0:base] = zeros_halo
    he_ref[:, base + HW:HW + 2 * base] = zeros_halo

    # ---- conv: depthwise 3x3 + bias -----------------------------------------
    he_ref[:, base:base + HW] = x_ref[...]
    h = _depthwise3x3(he_ref, w1, b1, mask_l, mask_r, H, W)

    # ---- prelu (single shared alpha, nn.PReLU default) -----------------------
    alpha = alpha_ref[0, 0]
    h = jnp.where(h > 0, h, alpha * h)

    # ---- conv_2: depthwise 3x3 + bias (interior of scratch overwritten) ------
    he_ref[:, base:base + HW] = h
    h = _depthwise3x3(he_ref, w2, b2, mask_l, mask_r, H, W)

    # ---- pointwise 1x1 (Cin -> Cout): block-diagonal mix on the MXU ----------
    out = jnp.dot(wpw_ref[...], h, preferred_element_type=jnp.float32)
    o_ref[...] = (out + bpw_ref[...]).astype(o_ref.dtype)


def separable_conv2d_forward(x_nchw, params):
    """SeparableConv2d forward.  x_nchw: (N, Cin, H, W) -> (N, Cout, H, W)."""
    N, Cin, H, W = x_nchw.shape
    Cout = params["w_pw"].shape[0]
    HW = H * W
    R = N * Cin
    RO = N * Cout

    # layout: NCHW -> (N*Cin, H*W) (contiguous reshape); padding happens in
    # kernel VMEM scratch, so the input DMA is exactly lane-aligned.
    x_flat = x_nchw.reshape(R, HW).astype(jnp.float32)

    # Packed per-(n, c)-row depthwise params (row = n*Cin + c):
    #   columns [0:9] = conv taps, [9] = conv bias, [10:19] = conv_2 taps,
    #   [19] = conv_2 bias.
    w1 = params["w_dw1"].reshape(Cin, 9).astype(jnp.float32)
    b1 = params["b_dw1"].reshape(Cin, 1).astype(jnp.float32)
    w2 = params["w_dw2"].reshape(Cin, 9).astype(jnp.float32)
    b2 = params["b_dw2"].reshape(Cin, 1).astype(jnp.float32)
    dwp = jnp.tile(jnp.concatenate([w1, b1, w2, b2], axis=1), (N, 1))   # (R, 20)

    # Pointwise 1x1 as a block-diagonal mix over the (n, c) row axis.
    wpw_big = jnp.kron(jnp.eye(N, dtype=jnp.float32),
                       params["w_pw"].reshape(Cout, Cin).astype(jnp.float32))  # (RO, R)
    bpw_t = jnp.tile(params["b_pw"].reshape(Cout, 1).astype(jnp.float32), (N, 1))

    # Column-boundary masks of the flattened spatial layout.
    col = jnp.arange(HW, dtype=jnp.int32) % W
    cmask = jnp.stack([(col >= 1), (col <= W - 2)], axis=0).astype(jnp.float32)  # (2, HW)

    alpha = jnp.asarray(params["alpha"], jnp.float32).reshape(1, 1)

    vmem = pl.BlockSpec(memory_space=pltpu.MemorySpace.VMEM)
    smem = pl.BlockSpec(memory_space=pltpu.MemorySpace.SMEM)

    out_flat = pl.pallas_call(
        functools.partial(separable_conv2d_kernel, H, W),
        out_shape=jax.ShapeDtypeStruct((RO, HW), jnp.float32),
        in_specs=[vmem, vmem, smem, vmem, vmem, vmem],
        out_specs=vmem,
        scratch_shapes=[pltpu.VMEM((R, HW + 2 * W + 2), jnp.float32)],
    )(x_flat, dwp, alpha, wpw_big, bpw_t, cmask)

    # layout: (N*Cout, H*W) -> NCHW (contiguous).
    return out_flat.reshape(N, Cout, H, W)


def reference_forward(x, params):
    """Pure-JAX reference (no Pallas) for correctness checking."""
    Cin = x.shape[1]
    dn = ("NCHW", "OIHW", "NCHW")
    prec = jax.lax.Precision.HIGHEST
    y = jax.lax.conv_general_dilated(
        x, params["w_dw1"], (1, 1), "SAME", dimension_numbers=dn,
        feature_group_count=Cin, precision=prec)
    y = y + params["b_dw1"][None, :, None, None]
    y = jnp.where(y > 0, y, params["alpha"] * y)
    y = jax.lax.conv_general_dilated(
        y, params["w_dw2"], (1, 1), "SAME", dimension_numbers=dn,
        feature_group_count=Cin, precision=prec)
    y = y + params["b_dw2"][None, :, None, None]
    y = jax.lax.conv_general_dilated(
        y, params["w_pw"], (1, 1), "VALID", dimension_numbers=dn, precision=prec)
    y = y + params["b_pw"][None, :, None, None]
    return y


def make_params(key, cin, cout):
    ks = jax.random.split(key, 6)
    return {
        "w_dw1": 0.3 * jax.random.normal(ks[0], (cin, 1, 3, 3), jnp.float32),
        "b_dw1": 0.1 * jax.random.normal(ks[1], (cin,), jnp.float32),
        "alpha": jnp.float32(0.25),   # nn.PReLU() default init
        "w_dw2": 0.3 * jax.random.normal(ks[2], (cin, 1, 3, 3), jnp.float32),
        "b_dw2": 0.1 * jax.random.normal(ks[3], (cin,), jnp.float32),
        "w_pw": 0.3 * jax.random.normal(ks[4], (cout, cin, 1, 1), jnp.float32),
        "b_pw": 0.1 * jax.random.normal(ks[5], (cout,), jnp.float32),
    }


if __name__ == "__main__":
    key = jax.random.PRNGKey(0)
    k_x, k_p = jax.random.split(key)

    N, Cin, Cout, H, W = 2, 4, 8, 16, 16
    x = jax.random.normal(k_x, (N, Cin, H, W), jnp.float32)
    params = make_params(k_p, Cin, Cout)

    out = jax.block_until_ready(separable_conv2d_forward(x, params))
    ref = jax.block_until_ready(reference_forward(x, params))

    assert out.shape == (N, Cout, H, W), out.shape
    max_err = float(jnp.max(jnp.abs(out - ref)))
    assert jnp.allclose(out, ref, atol=1e-4, rtol=1e-4), max_err

    print("KERNEL_OK")
</pallas_src>

<mosaic_0001>
module attributes {stable_mosaic.version = 11 : i64} {
  func.func @separable_conv2d_kernel(%arg0: memref<8x256xf32, #tpu.memory_space<vmem>>, %arg1: memref<8x20xf32, #tpu.memory_space<vmem>>, %arg2: memref<1x1xf32, #tpu.memory_space<smem>>, %arg3: memref<16x8xf32, #tpu.memory_space<vmem>>, %arg4: memref<16x1xf32, #tpu.memory_space<vmem>>, %arg5: memref<2x256xf32, #tpu.memory_space<vmem>>, %arg6: memref<16x256xf32, #tpu.memory_space<vmem>>, %arg7: memref<8x290xf32, #tpu.memory_space<vmem>>) attributes {dimension_semantics = [], scalar_prefetch = 0 : i64, scratch_operands = 1 : i64, tpu.core_type = #tpu.core_type<tc>} {
    %c0 = arith.constant 0 : index
    %c0_0 = arith.constant 0 : index
    %0 = vector.load %arg5[%c0, %c0_0] : memref<2x256xf32, #tpu.memory_space<vmem>>, vector<1x256xf32>
    %c1 = arith.constant 1 : index
    %c0_1 = arith.constant 0 : index
    %1 = vector.load %arg5[%c1, %c0_1] : memref<2x256xf32, #tpu.memory_space<vmem>>, vector<1x256xf32>
    %c0_2 = arith.constant 0 : index
    %c0_3 = arith.constant 0 : index
    %2 = vector.load %arg1[%c0_2, %c0_3] : memref<8x20xf32, #tpu.memory_space<vmem>>, vector<8x9xf32>
    %c0_4 = arith.constant 0 : index
    %c9 = arith.constant 9 : index
    %3 = vector.load %arg1[%c0_4, %c9] : memref<8x20xf32, #tpu.memory_space<vmem>>, vector<8x1xf32>
    %c0_5 = arith.constant 0 : index
    %c10 = arith.constant 10 : index
    %4 = vector.load %arg1[%c0_5, %c10] : memref<8x20xf32, #tpu.memory_space<vmem>>, vector<8x9xf32>
    %c0_6 = arith.constant 0 : index
    %c19 = arith.constant 19 : index
    %5 = vector.load %arg1[%c0_6, %c19] : memref<8x20xf32, #tpu.memory_space<vmem>>, vector<8x1xf32>
    %cst = arith.constant 0.000000e+00 : f32
    %6 = vector.broadcast %cst : f32 to vector<8x17xf32>
    %c0_7 = arith.constant 0 : index
    %c0_8 = arith.constant 0 : index
    %7 = vector.load %arg7[%c0_7, %c0_8] : memref<8x290xf32, #tpu.memory_space<vmem>>, vector<8x17xf32>
    tpu.vector_store %arg7[%c0_7, %c0_8], %6 {strides = array<i32>} : memref<8x290xf32, #tpu.memory_space<vmem>>, vector<8x17xf32>,
    %c0_9 = arith.constant 0 : index
    %c273 = arith.constant 273 : index
    %8 = vector.load %arg7[%c0_9, %c273] : memref<8x290xf32, #tpu.memory_space<vmem>>, vector<8x17xf32>
    tpu.vector_store %arg7[%c0_9, %c273], %6 {strides = array<i32>} : memref<8x290xf32, #tpu.memory_space<vmem>>, vector<8x17xf32>,
    %c0_10 = arith.constant 0 : index
    %c0_11 = arith.constant 0 : index
    %9 = vector.load %arg0[%c0_10, %c0_11] : memref<8x256xf32, #tpu.memory_space<vmem>>, vector<8x256xf32>
    %c0_12 = arith.constant 0 : index
    %c17 = arith.constant 17 : index
    %10 = vector.load %arg7[%c0_12, %c17] : memref<8x290xf32, #tpu.memory_space<vmem>>, vector<8x256xf32>
    tpu.vector_store %arg7[%c0_12, %c17], %9 {strides = array<i32>} : memref<8x290xf32, #tpu.memory_space<vmem>>, vector<8x256xf32>,
    %c0_13 = arith.constant 0 : index
    %c0_14 = arith.constant 0 : index
    %11 = vector.load %arg7[%c0_13, %c0_14] : memref<8x290xf32, #tpu.memory_space<vmem>>, vector<8x256xf32>
    %12 = vector.extract_strided_slice %2 {offsets = [0, 0], sizes = [8, 1], strides = [1, 1]} : vector<8x9xf32> to vector<8x1xf32>
    %13 = vector.broadcast %12 : vector<8x1xf32> to vector<8x256xf32>
    %14 = arith.mulf %11, %13 : vector<8x256xf32>
    %c0_15 = arith.constant 0 : index
    %c16 = arith.constant 16 : index
    %15 = vector.load %arg7[%c0_15, %c16] : memref<8x290xf32, #tpu.memory_space<vmem>>, vector<8x256xf32>
    %16 = vector.extract_strided_slice %2 {offsets = [0, 3], sizes = [8, 1], strides = [1, 1]} : vector<8x9xf32> to vector<8x1xf32>
    %17 = vector.broadcast %16 : vector<8x1xf32> to vector<8x256xf32>
    %18 = arith.mulf %15, %17 : vector<8x256xf32>
    %19 = arith.addf %14, %18 : vector<8x256xf32>
    %c0_16 = arith.constant 0 : index
    %c32 = arith.constant 32 : index
    %20 = vector.load %arg7[%c0_16, %c32] : memref<8x290xf32, #tpu.memory_space<vmem>>, vector<8x256xf32>
    %21 = vector.extract_strided_slice %2 {offsets = [0, 6], sizes = [8, 1], strides = [1, 1]} : vector<8x9xf32> to vector<8x1xf32>
    %22 = vector.broadcast %21 : vector<8x1xf32> to vector<8x256xf32>
    %23 = arith.mulf %20, %22 : vector<8x256xf32>
    %24 = arith.addf %19, %23 : vector<8x256xf32>
    %25 = vector.broadcast %0 : vector<1x256xf32> to vector<8x256xf32>
    %26 = arith.mulf %24, %25 : vector<8x256xf32>
    %c0_17 = arith.constant 0 : index
    %c1_18 = arith.constant 1 : index
    %27 = vector.load %arg7[%c0_17, %c1_18] : memref<8x290xf32, #tpu.memory_space<vmem>>, vector<8x256xf32>
    %28 = vector.extract_strided_slice %2 {offsets = [0, 1], sizes = [8, 1], strides = [1, 1]} : vector<8x9xf32> to vector<8x1xf32>
    %29 = vector.broadcast %28 : vector<8x1xf32> to vector<8x256xf32>
    %30 = arith.mulf %27, %29 : vector<8x256xf32>
    %c0_19 = arith.constant 0 : index
    %c17_20 = arith.constant 17 : index
    %31 = vector.load %arg7[%c0_19, %c17_20] : memref<8x290xf32, #tpu.memory_space<vmem>>, vector<8x256xf32>
    %32 = vector.extract_strided_slice %2 {offsets = [0, 4], sizes = [8, 1], strides = [1, 1]} : vector<8x9xf32> to vector<8x1xf32>
    %33 = vector.broadcast %32 : vector<8x1xf32> to vector<8x256xf32>
    %34 = arith.mulf %31, %33 : vector<8x256xf32>
    %35 = arith.addf %30, %34 : vector<8x256xf32>
    %c0_21 = arith.constant 0 : index
    %c33 = arith.constant 33 : index
    %36 = vector.load %arg7[%c0_21, %c33] : memref<8x290xf32, #tpu.memory_space<vmem>>, vector<8x256xf32>
    %37 = vector.extract_strided_slice %2 {offsets = [0, 7], sizes = [8, 1], strides = [1, 1]} : vector<8x9xf32> to vector<8x1xf32>
    %38 = vector.broadcast %37 : vector<8x1xf32> to vector<8x256xf32>
    %39 = arith.mulf %36, %38 : vector<8x256xf32>
    %40 = arith.addf %35, %39 : vector<8x256xf32>
    %41 = arith.addf %26, %40 : vector<8x256xf32>
    %c0_22 = arith.constant 0 : index
    %c2 = arith.constant 2 : index
    %42 = vector.load %arg7[%c0_22, %c2] : memref<8x290xf32, #tpu.memory_space<vmem>>, vector<8x256xf32>
    %43 = vector.extract_strided_slice %2 {offsets = [0, 2], sizes = [8, 1], strides = [1, 1]} : vector<8x9xf32> to vector<8x1xf32>
    %44 = vector.broadcast %43 : vector<8x1xf32> to vector<8x256xf32>
    %45 = arith.mulf %42, %44 : vector<8x256xf32>
    %c0_23 = arith.constant 0 : index
    %c18 = arith.constant 18 : index
    %46 = vector.load %arg7[%c0_23, %c18] : memref<8x290xf32, #tpu.memory_space<vmem>>, vector<8x256xf32>
    %47 = vector.extract_strided_slice %2 {offsets = [0, 5], sizes = [8, 1], strides = [1, 1]} : vector<8x9xf32> to vector<8x1xf32>
    %48 = vector.broadcast %47 : vector<8x1xf32> to vector<8x256xf32>
    %49 = arith.mulf %46, %48 : vector<8x256xf32>
    %50 = arith.addf %45, %49 : vector<8x256xf32>
    %c0_24 = arith.constant 0 : index
    %c34 = arith.constant 34 : index
    %51 = vector.load %arg7[%c0_24, %c34] : memref<8x290xf32, #tpu.memory_space<vmem>>, vector<8x256xf32>
    %52 = vector.extract_strided_slice %2 {offsets = [0, 8], sizes = [8, 1], strides = [1, 1]} : vector<8x9xf32> to vector<8x1xf32>
    %53 = vector.broadcast %52 : vector<8x1xf32> to vector<8x256xf32>
    %54 = arith.mulf %51, %53 : vector<8x256xf32>
    %55 = arith.addf %50, %54 : vector<8x256xf32>
    %56 = vector.broadcast %1 : vector<1x256xf32> to vector<8x256xf32>
    %57 = arith.mulf %55, %56 : vector<8x256xf32>
    %58 = arith.addf %41, %57 : vector<8x256xf32>
    %59 = vector.broadcast %3 : vector<8x1xf32> to vector<8x256xf32>
    %60 = arith.addf %58, %59 : vector<8x256xf32>
    %c0_25 = arith.constant 0 : index
    %c0_26 = arith.constant 0 : index
    %61 = memref.load %arg2[%c0_25, %c0_26] : memref<1x1xf32, #tpu.memory_space<smem>>
    %cst_27 = arith.constant 0.000000e+00 : f32
    %62 = vector.broadcast %cst_27 : f32 to vector<8x256xf32>
    %63 = arith.cmpf ogt, %60, %62 : vector<8x256xf32>
    %64 = vector.broadcast %61 : f32 to vector<8x256xf32>
    %65 = arith.mulf %64, %60 : vector<8x256xf32>
    %66 = arith.select %63, %60, %65 : vector<8x256xi1>, vector<8x256xf32>
    %c0_28 = arith.constant 0 : index
    %c17_29 = arith.constant 17 : index
    %67 = vector.load %arg7[%c0_28, %c17_29] : memref<8x290xf32, #tpu.memory_space<vmem>>, vector<8x256xf32>
    tpu.vector_store %arg7[%c0_28, %c17_29], %66 {strides = array<i32>} : memref<8x290xf32, #tpu.memory_space<vmem>>, vector<8x256xf32>,
    %c0_30 = arith.constant 0 : index
    %c0_31 = arith.constant 0 : index
    %68 = vector.load %arg7[%c0_30, %c0_31] : memref<8x290xf32, #tpu.memory_space<vmem>>, vector<8x256xf32>
    %69 = vector.extract_strided_slice %4 {offsets = [0, 0], sizes = [8, 1], strides = [1, 1]} : vector<8x9xf32> to vector<8x1xf32>
    %70 = vector.broadcast %69 : vector<8x1xf32> to vector<8x256xf32>
    %71 = arith.mulf %68, %70 : vector<8x256xf32>
    %c0_32 = arith.constant 0 : index
    %c16_33 = arith.constant 16 : index
    %72 = vector.load %arg7[%c0_32, %c16_33] : memref<8x290xf32, #tpu.memory_space<vmem>>, vector<8x256xf32>
    %73 = vector.extract_strided_slice %4 {offsets = [0, 3], sizes = [8, 1], strides = [1, 1]} : vector<8x9xf32> to vector<8x1xf32>
    %74 = vector.broadcast %73 : vector<8x1xf32> to vector<8x256xf32>
    %75 = arith.mulf %72, %74 : vector<8x256xf32>
    %76 = arith.addf %71, %75 : vector<8x256xf32>
    %c0_34 = arith.constant 0 : index
    %c32_35 = arith.constant 32 : index
    %77 = vector.load %arg7[%c0_34, %c32_35] : memref<8x290xf32, #tpu.memory_space<vmem>>, vector<8x256xf32>
    %78 = vector.extract_strided_slice %4 {offsets = [0, 6], sizes = [8, 1], strides = [1, 1]} : vector<8x9xf32> to vector<8x1xf32>
    %79 = vector.broadcast %78 : vector<8x1xf32> to vector<8x256xf32>
    %80 = arith.mulf %77, %79 : vector<8x256xf32>
    %81 = arith.addf %76, %80 : vector<8x256xf32>
    %82 = vector.broadcast %0 : vector<1x256xf32> to vector<8x256xf32>
    %83 = arith.mulf %81, %82 : vector<8x256xf32>
    %c0_36 = arith.constant 0 : index
    %c1_37 = arith.constant 1 : index
    %84 = vector.load %arg7[%c0_36, %c1_37] : memref<8x290xf32, #tpu.memory_space<vmem>>, vector<8x256xf32>
    %85 = vector.extract_strided_slice %4 {offsets = [0, 1], sizes = [8, 1], strides = [1, 1]} : vector<8x9xf32> to vector<8x1xf32>
    %86 = vector.broadcast %85 : vector<8x1xf32> to vector<8x256xf32>
    %87 = arith.mulf %84, %86 : vector<8x256xf32>
    %c0_38 = arith.constant 0 : index
    %c17_39 = arith.constant 17 : index
    %88 = vector.load %arg7[%c0_38, %c17_39] : memref<8x290xf32, #tpu.memory_space<vmem>>, vector<8x256xf32>
    %89 = vector.extract_strided_slice %4 {offsets = [0, 4], sizes = [8, 1], strides = [1, 1]} : vector<8x9xf32> to vector<8x1xf32>
    %90 = vector.broadcast %89 : vector<8x1xf32> to vector<8x256xf32>
    %91 = arith.mulf %88, %90 : vector<8x256xf32>
    %92 = arith.addf %87, %91 : vector<8x256xf32>
    %c0_40 = arith.constant 0 : index
    %c33_41 = arith.constant 33 : index
    %93 = vector.load %arg7[%c0_40, %c33_41] : memref<8x290xf32, #tpu.memory_space<vmem>>, vector<8x256xf32>
    %94 = vector.extract_strided_slice %4 {offsets = [0, 7], sizes = [8, 1], strides = [1, 1]} : vector<8x9xf32> to vector<8x1xf32>
    %95 = vector.broadcast %94 : vector<8x1xf32> to vector<8x256xf32>
    %96 = arith.mulf %93, %95 : vector<8x256xf32>
    %97 = arith.addf %92, %96 : vector<8x256xf32>
    %98 = arith.addf %83, %97 : vector<8x256xf32>
    %c0_42 = arith.constant 0 : index
    %c2_43 = arith.constant 2 : index
    %99 = vector.load %arg7[%c0_42, %c2_43] : memref<8x290xf32, #tpu.memory_space<vmem>>, vector<8x256xf32>
    %100 = vector.extract_strided_slice %4 {offsets = [0, 2], sizes = [8, 1], strides = [1, 1]} : vector<8x9xf32> to vector<8x1xf32>
    %101 = vector.broadcast %100 : vector<8x1xf32> to vector<8x256xf32>
    %102 = arith.mulf %99, %101 : vector<8x256xf32>
    %c0_44 = arith.constant 0 : index
    %c18_45 = arith.constant 18 : index
    %103 = vector.load %arg7[%c0_44, %c18_45] : memref<8x290xf32, #tpu.memory_space<vmem>>, vector<8x256xf32>
    %104 = vector.extract_strided_slice %4 {offsets = [0, 5], sizes = [8, 1], strides = [1, 1]} : vector<8x9xf32> to vector<8x1xf32>
    %105 = vector.broadcast %104 : vector<8x1xf32> to vector<8x256xf32>
    %106 = arith.mulf %103, %105 : vector<8x256xf32>
    %107 = arith.addf %102, %106 : vector<8x256xf32>
    %c0_46 = arith.constant 0 : index
    %c34_47 = arith.constant 34 : index
    %108 = vector.load %arg7[%c0_46, %c34_47] : memref<8x290xf32, #tpu.memory_space<vmem>>, vector<8x256xf32>
    %109 = vector.extract_strided_slice %4 {offsets = [0, 8], sizes = [8, 1], strides = [1, 1]} : vector<8x9xf32> to vector<8x1xf32>
    %110 = vector.broadcast %109 : vector<8x1xf32> to vector<8x256xf32>
    %111 = arith.mulf %108, %110 : vector<8x256xf32>
    %112 = arith.addf %107, %111 : vector<8x256xf32>
    %113 = vector.broadcast %1 : vector<1x256xf32> to vector<8x256xf32>
    %114 = arith.mulf %112, %113 : vector<8x256xf32>
    %115 = arith.addf %98, %114 : vector<8x256xf32>
    %116 = vector.broadcast %5 : vector<8x1xf32> to vector<8x256xf32>
    %117 = arith.addf %115, %116 : vector<8x256xf32>
    %c0_48 = arith.constant 0 : index
    %c0_49 = arith.constant 0 : index
    %118 = vector.load %arg3[%c0_48, %c0_49] : memref<16x8xf32, #tpu.memory_space<vmem>>, vector<16x8xf32>
    %cst_50 = arith.constant dense<0.000000e+00> : vector<16x256xf32>
    %119 = tpu.matmul %118, %117, %cst_50 {dimension_numbers = #tpu.dot_dimension_numbers<[1], [0], [0], [1], [0, 0, 1, 1], [], []>} : vector<16x8xf32>, vector<8x256xf32>, vector<16x256xf32> -> vector<16x256xf32>
    %c0_51 = arith.constant 0 : index
    %c0_52 = arith.constant 0 : index
    %120 = vector.load %arg4[%c0_51, %c0_52] : memref<16x1xf32, #tpu.memory_space<vmem>>, vector<16x1xf32>
    %121 = vector.broadcast %120 : vector<16x1xf32> to vector<16x256xf32>
    %122 = arith.addf %119, %121 : vector<16x256xf32>
    %c0_53 = arith.constant 0 : index
    %c0_54 = arith.constant 0 : index
    %123 = vector.load %arg6[%c0_53, %c0_54] : memref<16x256xf32, #tpu.memory_space<vmem>>, vector<16x256xf32>
    tpu.vector_store %arg6[%c0_53, %c0_54], %122 {strides = array<i32>} : memref<16x256xf32, #tpu.memory_space<vmem>>, vector<16x256xf32>,
    return
  }
}

</mosaic_0001>

<llo_original>
// kernel: tpu_custom_call.1
$region0: #{tpu_custom_call.1}
  #allocation0 [shape = 'u32[]', space=smem, size = 0x4, offset = 0x4, fixed_abs, tag = 'smem constant byte address 0x4 - core index']
  #allocation1 [shape = 'u32[72,128]{1,0:T(1,128)}', space=vmem, size = 0x9000, scoped, tag = 'internal scratch']
  #allocation2 [shape = 'f32[8,290]{1,0:T(8,128)}', space=vmem, size = 0x3000, scoped, tag = 'scratch operand']
  #allocation3 [shape = 'f32[1,1]{1,0:T(1,128)S(6)}', space=smem, size = 0x200, scoped, tag = 'scoped memory for tpu_custom_call.1']
  %s0 = inlined_call_operand.vmem [shape: f32[8,256], index: 0, kind: input, shape index: {}]
  %s1 = inlined_call_operand.vmem [shape: f32[8,20], index: 1, kind: input, shape index: {}]
  %s2 = inlined_call_operand.<no memory space> [shape: f32[1,1], index: 2, kind: input, shape index: {}]
  %s3 = inlined_call_operand.vmem [shape: f32[16,8], index: 3, kind: input, shape index: {}]
  %s4 = inlined_call_operand.vmem [shape: f32[16,1], index: 4, kind: input, shape index: {}]
  %s5 = inlined_call_operand.vmem [shape: f32[2,256], index: 5, kind: input, shape index: {}]
  %s6 = inlined_call_operand.hbm [shape: f32[16,256], index: 6, kind: output, shape index: {}]
  %s7 = sld [smem:[#allocation0]]
  $region34: #{tpu_custom_call.1} parent=0
    _
  %s9 = ssub.s32 1, %s7
  %s10 = scalar_select 0, %s9, %s7
  %11 = sst [smem:[#allocation3]] %s2
  $region1: #{tpu_custom_call.1} parent=0
    #allocation4 [shape = 'u8[16384]{0}', space=vmem, size = 0x4000, scoped, tag = 'output window, operand 0, single buffered']
    #allocation5 [shape = 's32[1]{0}', space=sflag, size = 0x4, scoped, tag = 'scoped memory for tpu_custom_call.1']
    %12 = vsyncpa [#allocation5], 0
    // Predicated region
    $region2: #{tpu_custom_call.1} parent=1 // pred_check
      _
    $region3: #{tpu_custom_call.1} parent=1 // pred_check_branch
      %14 = sbr.rel (0) target = $region5
    $region4: #{tpu_custom_call.1} parent=1 // pred_region
      _
    $region5: #{tpu_custom_call.1} parent=1 // pred_fallthru
      _
    // Predicated region
    $region6: #{tpu_custom_call.1} parent=1 // pred_check
      _
    $region7: #{tpu_custom_call.1} parent=1 // pred_check_branch
      %16 = sbr.rel (0) target = $region9
    $region8: #{tpu_custom_call.1} parent=1 // pred_region
      _
    $region9: #{tpu_custom_call.1} parent=1 // pred_fallthru
      _
    // Predicated region
    $region10: #{tpu_custom_call.1} parent=1 // pred_check
      _
    $region11: #{tpu_custom_call.1} parent=1 // pred_check_branch
      %18 = sbr.rel (0) target = $region13
    $region12: #{tpu_custom_call.1} parent=1 // pred_region
      _
    $region13: #{tpu_custom_call.1} parent=1 // pred_fallthru
      _
    // Predicated region
    $region14: #{tpu_custom_call.1} parent=1 // pred_check
      _
    $region15: #{tpu_custom_call.1} parent=1 // pred_check_branch
      %20 = sbr.rel (0) target = $region17
    $region16: #{tpu_custom_call.1} parent=1 // pred_region
      _
    $region17: #{tpu_custom_call.1} parent=1 // pred_fallthru
      _
    // Predicated region
    $region18: #{tpu_custom_call.1} parent=1 // pred_check
      _
    $region19: #{tpu_custom_call.1} parent=1 // pred_check_branch
      %22 = sbr.rel (0) target = $region21
    $region20: #{tpu_custom_call.1} parent=1 // pred_region
      _
    $region21: #{tpu_custom_call.1} parent=1 // pred_fallthru
      _
    // Predicated region
    $region22: #{tpu_custom_call.1} parent=1 // pred_check
      _
    $region23: #{tpu_custom_call.1} parent=1 // pred_check_branch
      %24 = sbr.rel (0) target = $region25
    $region24: #{tpu_custom_call.1} parent=1 // pred_region
      _
    $region25: #{tpu_custom_call.1} parent=1 // pred_fallthru
      _
    %v25 = vld [vmem:[%s5] ss:$2 sm:$0x3]
    %s26 = scalar_lea.vmem %s5, 1
    %v27 = vld [vmem:[%s26] ss:$2 sm:$0x3]
    %v28 = vld [vmem:[%s1] sm:$0xff]
    %vm29 = vcmask 138240
    %30 = vst.msk [vmem:[#allocation2] sm:$0xff] %vm29, 0.0
    %vm31 = vcmask 277640
    %32 = vst.msk [vmem:[#allocation2 + $0x10] sm:$0xff] %vm31, 0.0
    %v33 = vld [vmem:[%s0] sm:$0xff]
    %v34 = vld [vmem:[%s0 + $0x8] sm:$0xff]
    %37 = vrot.lane.b32.xlu0 %v33, 17
    %v38 = vpop.permute.xlu0 %37
    %39 = vrot.lane.b32.xlu0 %v34, 17
    %v40 = vpop.permute.xlu0 %39
    %v41 = vsel %vm29, %v38, %v40
    %vm45 = vcmask 1047688
    %46 = vst.msk [vmem:[#allocation2] sm:$0xff] %vm45, %v38
    %47 = vst [vmem:[#allocation2 + $0x8] sm:$0xff] %v41
    %48 = vst.msk [vmem:[#allocation2 + $0x10] sm:$0xff] %vm29, %v40
    %v49 = vld [vmem:[#allocation2] sm:$0xff]
    %v50 = vld [vmem:[#allocation2 + $0x8] sm:$0xff]
    %52 = vset.pattern.permute.xlu0 0
    %53 = vperm.xlu0 %52, %v28
    %v54 = vpop.permute.xlu0 %53
    %v56 = vmul.f32 %v49, %v54
    %v57 = vmul.f32 %v50, %v54
    %v58 = vld [vmem:[#allocation2] sm:$0xff]
    %v59 = vld [vmem:[#allocation2 + $0x8] sm:$0xff]
    %v60 = vld [vmem:[#allocation2 + $0x10] sm:$0xff]
    %61 = vset.pattern.permute.xlu0 3
    %62 = vperm.xlu0 %61, %v28
    %v63 = vpop.permute.xlu0 %62
    %v65 = vmul.f32 %v58, %v63
    %v66 = vmul.f32 %v59, %v63
    %v67 = vmul.f32 %v60, %v63
    %71 = vrot.lane.b32.xlu0 %v65, 112
    %v72 = vpop.permute.xlu0 %71
    %73 = vrot.lane.b32.xlu0 %v66, 112
    %v74 = vpop.permute.xlu0 %73
    %75 = vrot.lane.b32.xlu0 %v67, 112
    %v76 = vpop.permute.xlu0 %75
    %vm77 = vcmask 916480
    %v78 = vsel %vm77, %v72, %v74
    %v79 = vsel %vm77, %v74, %v76
    %v82 = vadd.f32 %v56, %v78
    %v83 = vadd.f32 %v57, %v79
    %84 = vset.pattern.permute.xlu0 6
    %85 = vperm.xlu0 %84, %v28
    %v86 = vpop.permute.xlu0 %85
    %v88 = vmul.f32 %v58, %v86
    %v89 = vmul.f32 %v59, %v86
    %v90 = vmul.f32 %v60, %v86
    %94 = vrot.lane.b32.xlu0 %v88, 96
    %v95 = vpop.permute.xlu0 %94
    %96 = vrot.lane.b32.xlu0 %v89, 96
    %v97 = vpop.permute.xlu0 %96
    %98 = vrot.lane.b32.xlu0 %v90, 96
    %v99 = vpop.permute.xlu0 %98
    %vm100 = vcmask 785408
    %v101 = vsel %vm100, %v95, %v97
    %v102 = vsel %vm100, %v97, %v99
    %v105 = vadd.f32 %v82, %v101
    %v106 = vadd.f32 %v83, %v102
    %v108 = vperm.slane %v25, 0
    %v109 = vperm.slane %v25, 1
    %v112 = vmul.f32 %v105, %v108
    %v113 = vmul.f32 %v106, %v109
    %114 = vset.pattern.permute.xlu0 1
    %115 = vperm.xlu0 %114, %v28
    %v116 = vpop.permute.xlu0 %115
    %v118 = vmul.f32 %v58, %v116
    %v119 = vmul.f32 %v59, %v116
    %v120 = vmul.f32 %v60, %v116
    %121 = vset.pattern.permute.xlu0 4
    %122 = vperm.xlu0 %121, %v28
    %v123 = vpop.permute.xlu0 %122
    %v125 = vmul.f32 %v58, %v123
    %v126 = vmul.f32 %v59, %v123
    %v127 = vmul.f32 %v60, %v123
    %131 = vrot.lane.b32.xlu0 %v125, 112
    %v132 = vpop.permute.xlu0 %131
    %133 = vrot.lane.b32.xlu0 %v126, 112
    %v134 = vpop.permute.xlu0 %133
    %135 = vrot.lane.b32.xlu0 %v127, 112
    %v136 = vpop.permute.xlu0 %135
    %v137 = vsel %vm77, %v132, %v134
    %v138 = vsel %vm77, %v134, %v136
    %v142 = vadd.f32 %v118, %v137
    %v143 = vadd.f32 %v119, %v138
    %v144 = vadd.f32 %v120, %v136
    %145 = vset.pattern.permute.xlu0 7
    %146 = vperm.xlu0 %145, %v28
    %v147 = vpop.permute.xlu0 %146
    %v149 = vmul.f32 %v58, %v147
    %v150 = vmul.f32 %v59, %v147
    %v151 = vmul.f32 %v60, %v147
    %155 = vrot.lane.b32.xlu0 %v149, 96
    %v156 = vpop.permute.xlu0 %155
    %157 = vrot.lane.b32.xlu0 %v150, 96
    %v158 = vpop.permute.xlu0 %157
    %159 = vrot.lane.b32.xlu0 %v151, 96
    %v160 = vpop.permute.xlu0 %159
    %v161 = vsel %vm100, %v156, %v158
    %v162 = vsel %vm100, %v158, %v160
    %v166 = vadd.f32 %v142, %v161
    %v167 = vadd.f32 %v143, %v162
    %v168 = vadd.f32 %v144, %v160
    %172 = vrot.lane.b32.xlu0 %v166, 127
    %v173 = vpop.permute.xlu0 %172
    %174 = vrot.lane.b32.xlu0 %v167, 127
    %v175 = vpop.permute.xlu0 %174
    %176 = vrot.lane.b32.xlu0 %v168, 127
    %v177 = vpop.permute.xlu0 %176
    %vm178 = vcmask 1039360
    %v179 = vsel %vm178, %v173, %v175
    %v180 = vsel %vm178, %v175, %v177
    %v183 = vadd.f32 %v112, %v179
    %v184 = vadd.f32 %v113, %v180
    %185 = vset.pattern.permute.xlu0 2
    %186 = vperm.xlu0 %185, %v28
    %v187 = vpop.permute.xlu0 %186
    %v189 = vmul.f32 %v58, %v187
    %v190 = vmul.f32 %v59, %v187
    %v191 = vmul.f32 %v60, %v187
    %192 = vset.pattern.permute.xlu0 5
    %193 = vperm.xlu0 %192, %v28
    %v194 = vpop.permute.xlu0 %193
    %v196 = vmul.f32 %v58, %v194
    %v197 = vmul.f32 %v59, %v194
    %v198 = vmul.f32 %v60, %v194
    %202 = vrot.lane.b32.xlu0 %v196, 112
    %v203 = vpop.permute.xlu0 %202
    %204 = vrot.lane.b32.xlu0 %v197, 112
    %v205 = vpop.permute.xlu0 %204
    %206 = vrot.lane.b32.xlu0 %v198, 112
    %v207 = vpop.permute.xlu0 %206
    %v208 = vsel %vm77, %v203, %v205
    %v209 = vsel %vm77, %v205, %v207
    %v213 = vadd.f32 %v189, %v208
    %v214 = vadd.f32 %v190, %v209
    %v215 = vadd.f32 %v191, %v207
    %216 = vset.pattern.permute.xlu0 8
    %217 = vperm.xlu0 %216, %v28
    %v218 = vpop.permute.xlu0 %217
    %v220 = vmul.f32 %v58, %v218
    %v221 = vmul.f32 %v59, %v218
    %v222 = vmul.f32 %v60, %v218
    %226 = vrot.lane.b32.xlu0 %v220, 96
    %v227 = vpop.permute.xlu0 %226
    %228 = vrot.lane.b32.xlu0 %v221, 96
    %v229 = vpop.permute.xlu0 %228
    %230 = vrot.lane.b32.xlu0 %v222, 96
    %v231 = vpop.permute.xlu0 %230
    %v232 = vsel %vm100, %v227, %v229
    %v233 = vsel %vm100, %v229, %v231
    %v237 = vadd.f32 %v213, %v232
    %v238 = vadd.f32 %v214, %v233
    %v239 = vadd.f32 %v215, %v231
    %v241 = vperm.slane %v27, 0
    %v242 = vperm.slane %v27, 1
    %243 = vrot.lane.b32.xlu0 %v241, 2
    %v244 = vpop.permute.xlu0 %243
    %245 = vrot.lane.b32.xlu0 %v242, 2
    %v246 = vpop.permute.xlu0 %245
    %vm247 = vcmask 15360
    %v248 = vsel %vm247, %v244, %v246
    %v252 = vmul.f32 %v237, %v244
    %v253 = vmul.f32 %v238, %v248
    %v254 = vmul.f32 %v239, %v246
    %258 = vrot.lane.b32.xlu0 %v252, 126
    %v259 = vpop.permute.xlu0 %258
    %260 = vrot.lane.b32.xlu0 %v253, 126
    %v261 = vpop.permute.xlu0 %260
    %262 = vrot.lane.b32.xlu0 %v254, 126
    %v263 = vpop.permute.xlu0 %262
    %vm264 = vcmask 1031168
    %v265 = vsel %vm264, %v259, %v261
    %v266 = vsel %vm264, %v261, %v263
    %v269 = vadd.f32 %v183, %v265
    %v270 = vadd.f32 %v184, %v266
    %271 = vset.pattern.permute.xlu0 9
    %272 = vperm.xlu0 %271, %v28
    %v273 = vpop.permute.xlu0 %272
    %v275 = vadd.f32 %v269, %v273
    %v276 = vadd.f32 %v270, %v273
    %s277 = sld [smem:[#allocation3]]
    %vm278 = vcmp.gt.f32.partialorder %v275, 0.0
    %vm279 = vcmp.gt.f32.partialorder %v276, 0.0
    %v280 = vstv %s277
    %v281 = vmul.f32 %v280, %v275
    %v282 = vmul.f32 %v280, %v276
    %v283 = vsel %vm278, %v275, %v281
    %v284 = vsel %vm279, %v276, %v282
    %287 = vrot.lane.b32.xlu0 %v283, 17
    %v288 = vpop.permute.xlu0 %287
    %289 = vrot.lane.b32.xlu0 %v284, 17
    %v290 = vpop.permute.xlu0 %289
    %v291 = vsel %vm29, %v288, %v290
    %295 = vst.msk [vmem:[#allocation2] sm:$0xff] %vm45, %v288
    %296 = vst [vmem:[#allocation2 + $0x8] sm:$0xff] %v291
    %297 = vst.msk [vmem:[#allocation2 + $0x10] sm:$0xff] %vm29, %v290
    %v298 = vld [vmem:[#allocation2] sm:$0xff]
    %v299 = vld [vmem:[#allocation2 + $0x8] sm:$0xff]
    %300 = vset.pattern.permute.xlu0 10
    %301 = vperm.xlu0 %300, %v28
    %v302 = vpop.permute.xlu0 %301
    %v304 = vmul.f32 %v298, %v302
    %v305 = vmul.f32 %v299, %v302
    %v306 = vld [vmem:[#allocation2] sm:$0xff]
    %v307 = vld [vmem:[#allocation2 + $0x8] sm:$0xff]
    %v308 = vld [vmem:[#allocation2 + $0x10] sm:$0xff]
    %309 = vset.pattern.permute.xlu0 13
    %310 = vperm.xlu0 %309, %v28
    %v311 = vpop.permute.xlu0 %310
    %v313 = vmul.f32 %v306, %v311
    %v314 = vmul.f32 %v307, %v311
    %v315 = vmul.f32 %v308, %v311
    %319 = vrot.lane.b32.xlu0 %v313, 112
    %v320 = vpop.permute.xlu0 %319
    %321 = vrot.lane.b32.xlu0 %v314, 112
    %v322 = vpop.permute.xlu0 %321
    %323 = vrot.lane.b32.xlu0 %v315, 112
    %v324 = vpop.permute.xlu0 %323
    %v325 = vsel %vm77, %v320, %v322
    %v326 = vsel %vm77, %v322, %v324
    %v329 = vadd.f32 %v304, %v325
    %v330 = vadd.f32 %v305, %v326
    %331 = vset.pattern.permute.xlu0 16
    %332 = vperm.xlu0 %331, %v28
    %v333 = vpop.permute.xlu0 %332
    %v335 = vmul.f32 %v306, %v333
    %v336 = vmul.f32 %v307, %v333
    %v337 = vmul.f32 %v308, %v333
    %341 = vrot.lane.b32.xlu0 %v335, 96
    %v342 = vpop.permute.xlu0 %341
    %343 = vrot.lane.b32.xlu0 %v336, 96
    %v344 = vpop.permute.xlu0 %343
    %345 = vrot.lane.b32.xlu0 %v337, 96
    %v346 = vpop.permute.xlu0 %345
    %v347 = vsel %vm100, %v342, %v344
    %v348 = vsel %vm100, %v344, %v346
    %v351 = vadd.f32 %v329, %v347
    %v352 = vadd.f32 %v330, %v348
    %v353 = vmul.f32 %v351, %v108
    %v354 = vmul.f32 %v352, %v109
    %355 = vset.pattern.permute.xlu0 11
    %356 = vperm.xlu0 %355, %v28
    %v357 = vpop.permute.xlu0 %356
    %v359 = vmul.f32 %v306, %v357
    %v360 = vmul.f32 %v307, %v357
    %v361 = vmul.f32 %v308, %v357
    %362 = vset.pattern.permute.xlu0 14
    %363 = vperm.xlu0 %362, %v28
    %v364 = vpop.permute.xlu0 %363
    %v366 = vmul.f32 %v306, %v364
    %v367 = vmul.f32 %v307, %v364
    %v368 = vmul.f32 %v308, %v364
    %372 = vrot.lane.b32.xlu0 %v366, 112
    %v373 = vpop.permute.xlu0 %372
    %374 = vrot.lane.b32.xlu0 %v367, 112
    %v375 = vpop.permute.xlu0 %374
    %376 = vrot.lane.b32.xlu0 %v368, 112
    %v377 = vpop.permute.xlu0 %376
    %v378 = vsel %vm77, %v373, %v375
    %v379 = vsel %vm77, %v375, %v377
    %v383 = vadd.f32 %v359, %v378
    %v384 = vadd.f32 %v360, %v379
    %v385 = vadd.f32 %v361, %v377
    %386 = vset.pattern.permute.xlu0 17
    %387 = vperm.xlu0 %386, %v28
    %v388 = vpop.permute.xlu0 %387
    %v390 = vmul.f32 %v306, %v388
    %v391 = vmul.f32 %v307, %v388
    %v392 = vmul.f32 %v308, %v388
    %396 = vrot.lane.b32.xlu0 %v390, 96
    %v397 = vpop.permute.xlu0 %396
    %398 = vrot.lane.b32.xlu0 %v391, 96
    %v399 = vpop.permute.xlu0 %398
    %400 = vrot.lane.b32.xlu0 %v392, 96
    %v401 = vpop.permute.xlu0 %400
    %v402 = vsel %vm100, %v397, %v399
    %v403 = vsel %vm100, %v399, %v401
    %v407 = vadd.f32 %v383, %v402
    %v408 = vadd.f32 %v384, %v403
    %v409 = vadd.f32 %v385, %v401
    %413 = vrot.lane.b32.xlu0 %v407, 127
    %v414 = vpop.permute.xlu0 %413
    %415 = vrot.lane.b32.xlu0 %v408, 127
    %v416 = vpop.permute.xlu0 %415
    %417 = vrot.lane.b32.xlu0 %v409, 127
    %v418 = vpop.permute.xlu0 %417
    %v419 = vsel %vm178, %v414, %v416
    %v420 = vsel %vm178, %v416, %v418
    %v423 = vadd.f32 %v353, %v419
    %v424 = vadd.f32 %v354, %v420
    %425 = vset.pattern.permute.xlu0 12
    %426 = vperm.xlu0 %425, %v28
    %v427 = vpop.permute.xlu0 %426
    %v429 = vmul.f32 %v306, %v427
    %v430 = vmul.f32 %v307, %v427
    %v431 = vmul.f32 %v308, %v427
    %432 = vset.pattern.permute.xlu0 15
    %433 = vperm.xlu0 %432, %v28
    %v434 = vpop.permute.xlu0 %433
    %v436 = vmul.f32 %v306, %v434
    %v437 = vmul.f32 %v307, %v434
    %v438 = vmul.f32 %v308, %v434
    %442 = vrot.lane.b32.xlu0 %v436, 112
    %v443 = vpop.permute.xlu0 %442
    %444 = vrot.lane.b32.xlu0 %v437, 112
    %v445 = vpop.permute.xlu0 %444
    %446 = vrot.lane.b32.xlu0 %v438, 112
    %v447 = vpop.permute.xlu0 %446
    %v448 = vsel %vm77, %v443, %v445
    %v449 = vsel %vm77, %v445, %v447
    %v453 = vadd.f32 %v429, %v448
    %v454 = vadd.f32 %v430, %v449
    %v455 = vadd.f32 %v431, %v447
    %456 = vset.pattern.permute.xlu0 18
    %457 = vperm.xlu0 %456, %v28
    %v458 = vpop.permute.xlu0 %457
    %v460 = vmul.f32 %v306, %v458
    %v461 = vmul.f32 %v307, %v458
    %v462 = vmul.f32 %v308, %v458
    %466 = vrot.lane.b32.xlu0 %v460, 96
    %v467 = vpop.permute.xlu0 %466
    %468 = vrot.lane.b32.xlu0 %v461, 96
    %v469 = vpop.permute.xlu0 %468
    %470 = vrot.lane.b32.xlu0 %v462, 96
    %v471 = vpop.permute.xlu0 %470
    %v472 = vsel %vm100, %v467, %v469
    %v473 = vsel %vm100, %v469, %v471
    %v477 = vadd.f32 %v453, %v472
    %v478 = vadd.f32 %v454, %v473
    %v479 = vadd.f32 %v455, %v471
    %v480 = vmul.f32 %v477, %v244
    %v481 = vmul.f32 %v478, %v248
    %v482 = vmul.f32 %v479, %v246
    %486 = vrot.lane.b32.xlu0 %v480, 126
    %v487 = vpop.permute.xlu0 %486
    %488 = vrot.lane.b32.xlu0 %v481, 126
    %v489 = vpop.permute.xlu0 %488
    %490 = vrot.lane.b32.xlu0 %v482, 126
    %v491 = vpop.permute.xlu0 %490
    %v492 = vsel %vm264, %v487, %v489
    %v493 = vsel %vm264, %v489, %v491
    %v496 = vadd.f32 %v423, %v492
    %v497 = vadd.f32 %v424, %v493
    %498 = vset.pattern.permute.xlu0 19
    %499 = vperm.xlu0 %498, %v28
    %v500 = vpop.permute.xlu0 %499
    %v502 = vadd.f32 %v496, %v500
    %v503 = vadd.f32 %v497, %v500
    %v504 = vld [vmem:[%s3] sm:$0xff]
    %v505 = vld [vmem:[%s3 + $0x8] sm:$0xff]
    %v506 = vld [vmem:[%s4] sm:$0xff]
    %v507 = vld [vmem:[%s4 + $0x8] sm:$0xff]
    %509 = vset.pattern.permute.xlu0 0
    %510 = vperm.xlu0 %509, %v506
    %v511 = vpop.permute.xlu0 %510
    %514 = vset.pattern.permute.xlu0 0
    %515 = vperm.xlu0 %514, %v507
    %v516 = vpop.permute.xlu0 %515
    %vm518 = vcmask 64512
    %v520 = vsel %vm518, %v504, 0
    %v523 = vsel %vm518, %v505, 0
    %525 = vmatpush.msra.mxu0 0.0
    %526 = vmatpush.msra.mxu0 0.0
    %527 = vmatpush.msra.mxu0 0.0
    %528 = vmatpush.msra.mxu0 0.0
    %529 = vmatpush.msra.mxu0 0.0
    %530 = vmatpush.msra.mxu0 0.0
    %531 = vmatpush.msra.mxu0 0.0
    %532 = vmatpush.msra.mxu0 0.0
    %533 = vmatpush.msra.mxu0 0.0
    %534 = vmatpush.msra.mxu0 0.0
    %535 = vmatpush.msra.mxu0 0.0
    %536 = vmatpush.msra.mxu0 0.0
    %537 = vmatpush.msra.mxu0 0.0
    %538 = vmatpush.msra.mxu0 0.0
    %539 = vmatpush.msra.mxu0 0.0
    %540 = vmatpush.msra.mxu0 %v502
    %541 = vmatmul.f32.gmra.mxu0 %v520
    %v542 = vpop.f32.mrf.mxu0
    %v543 = vadd.f32 %v511, %v542
    %544 = vmatmul.f32.gmra.mxu0 %v523
    %v545 = vpop.f32.mrf.mxu0
    %v546 = vadd.f32 %v516, %v545
    %547 = vdwg.mxu0
    %548 = vmatpush.msra.mxu0 0.0
    %549 = vmatpush.msra.mxu0 0.0
    %550 = vmatpush.msra.mxu0 0.0
    %551 = vmatpush.msra.mxu0 0.0
    %552 = vmatpush.msra.mxu0 0.0
    %553 = vmatpush.msra.mxu0 0.0
    %554 = vmatpush.msra.mxu0 0.0
    %555 = vmatpush.msra.mxu0 0.0
    %556 = vmatpush.msra.mxu0 0.0
    %557 = vmatpush.msra.mxu0 0.0
    %558 = vmatpush.msra.mxu0 0.0
    %559 = vmatpush.msra.mxu0 0.0
    %560 = vmatpush.msra.mxu0 0.0
    %561 = vmatpush.msra.mxu0 0.0
    %562 = vmatpush.msra.mxu0 0.0
    %563 = vmatpush.msra.mxu0 %v503
    %564 = vmatmul.f32.gmra.mxu0 %v520
    %v565 = vpop.f32.mrf.mxu0
    %v566 = vadd.f32 %v511, %v565
    %567 = vmatmul.f32.gmra.mxu0 %v523
    %v568 = vpop.f32.mrf.mxu0
    %v569 = vadd.f32 %v516, %v568
    %570 = vdwg.mxu0
    %571 = vst [vmem:[#allocation4] sm:$0xff] %v543
    %572 = vst [vmem:[#allocation4 + $0x8] sm:$0xff] %v566
    %573 = vst [vmem:[#allocation4 + $0x10] sm:$0xff] %v546
    %574 = vst [vmem:[#allocation4 + $0x18] sm:$0xff] %v569
    // Predicated region
    $region26: #{tpu_custom_call.1} parent=1 // pred_check
      _
    $region27: #{tpu_custom_call.1} parent=1 // pred_check_branch
      %576 = sbr.rel (0) target = $region29
    $region28: #{tpu_custom_call.1} parent=1 // pred_region
      %578 = vsyncadd [#allocation5], 0
      %s579 = sshll.u32 [#allocation4], 4
      %s580 = int_to_ptr.vmem [resolvable:$true] %s579
      %s581 = sshll.u32 %s6, 4
      %s582 = int_to_ptr.hbm [resolvable:$true] %s581
      %587 = dma.vmem_to_hbm [thread:$0]  %s580, 512, %s582, [#allocation5], 256, 256, 16
    $region29: #{tpu_custom_call.1} parent=1 // pred_fallthru
      _
    // Predicated region
    $region30: #{tpu_custom_call.1} parent=1 // pred_check
      _
    $region31: #{tpu_custom_call.1} parent=1 // pred_check_branch
      %589 = sbr.rel (0) target = $region33
    $region32: #{tpu_custom_call.1} parent=1 // pred_region
      %591 = dma.done [#allocation5], 512
    $region33: #{tpu_custom_call.1} parent=1 // pred_fallthru
      _
    %592 = vsyncpa [#allocation5], 1

</llo_original>
